<compile_context>
chip_gen: v5e
topology: v5e:2x2
jax: 0.10.0
libtpu: 0.0.40
codegen_flags: <defaults>
</compile_context>

<pallas_src>
import functools
import math

import jax
import jax.numpy as jnp
from jax.experimental import pallas as pl
from jax.experimental.pallas import tpu as pltpu


def _bytenet_decoder_kernel(x_ref, w1_ref, b1_ref, w2f_ref, b2f_ref, o_ref, *, eps):
    # GEMM1 on the MXU: bf16 x bf16 -> f32 accumulate.
    x = x_ref[...].astype(jnp.bfloat16)
    h = jnp.dot(x, w1_ref[...], preferred_element_type=jnp.float32) + b1_ref[...]
    # ReLU (f32 on the VPU).
    h = jnp.maximum(h, 0.0)
    # LayerNorm statistics, two-pass form (no E[h^2]-E[h]^2 cancellation).
    mean = jnp.mean(h, axis=-1, keepdims=True)
    hc = h - mean
    var = jnp.mean(hc * hc, axis=-1, keepdims=True)
    hn = hc * jax.lax.rsqrt(var + eps)          # normalized, O(1) values, f32
    # GEMM2 on the MXU (bf16): gamma folded into w2f, beta@w2 + b2 into b2f.
    out = jnp.dot(hn.astype(jnp.bfloat16), w2f_ref[...],
                  preferred_element_type=jnp.float32) + b2f_ref[...]
    # Output last dim (20) < 128 -> masked stores; write bytes are a tiny
    # fraction of the feature stream, so keep the narrow layout.
    o_ref[...] = out.astype(o_ref.dtype)


def bytenet_decoder(features, w1, b1, gamma, beta, w2, b2, *, eps=1e-12,
                    block_rows=8192, vmem_limit_bytes=56 * 1024 * 1024):
    """Fused dense -> ReLU -> LayerNorm -> decoder head.

    features: [..., D] (any float dtype; passed through un-copied);
    w1: [D, D] (in, out); b1, gamma, beta: [D]; w2: [D, C]; b2: [C].
    Returns [..., C] float32.
    """
    D = w1.shape[0]
    C = w2.shape[1]
    lead = features.shape[:-1]
    # Keep the dominant HBM stream in its native dtype; the kernel casts to
    # bf16 for the MXU.  (Upstream bf16 halves read traffic for free.)
    x = features.reshape(-1, D)
    n = x.shape[0]

    # --- constant folds on weights (trace-time, not per-row work) ---
    w1_b = w1.astype(jnp.bfloat16)                                 # [D, D]
    b1_r = b1.reshape(1, D).astype(jnp.float32)                    # [1, D]
    w2_f32 = w2.astype(jnp.float32)
    w2f = (gamma.astype(jnp.float32)[:, None] * w2_f32).astype(jnp.bfloat16)  # [D, C]
    b2f = (beta.astype(jnp.float32) @ w2_f32
           + b2.astype(jnp.float32)).reshape(1, C)                 # [1, C] f32

    # --- row tiling: no padding copy; Pallas masks the ragged last block ---
    tb = int(block_rows)
    if n < tb:
        tb = max(8, ((n + 7) // 8) * 8)
    grid = (pl.cdiv(n, tb),)

    out = pl.pallas_call(
        functools.partial(_bytenet_decoder_kernel, eps=eps),
        out_shape=jax.ShapeDtypeStruct((n, C), jnp.float32),
        grid_spec=pltpu.PrefetchScalarGridSpec(
            num_scalar_prefetch=0,
            grid=grid,
            in_specs=[
                pl.BlockSpec((tb, D), lambda i: (i, 0)),   # features tile (pipelined)
                pl.BlockSpec((D, D), lambda i: (0, 0)),    # w1 (VMEM-resident, bf16)
                pl.BlockSpec((1, D), lambda i: (0, 0)),    # b1
                pl.BlockSpec((D, C), lambda i: (0, 0)),    # w2f = gamma*w2 (bf16)
                pl.BlockSpec((1, C), lambda i: (0, 0)),    # b2f = beta@w2 + b2
            ],
            out_specs=pl.BlockSpec((tb, C), lambda i: (i, 0)),
        ),
        compiler_params=pltpu.CompilerParams(
            # Row grid shards across both TensorCores on v7x; harmless on
            # v5e/v6e.  Explicit VMEM budget: under v7x's 64 MiB physical,
            # above v5e/v6e scoped defaults so big tiles don't fail compile.
            dimension_semantics=("parallel",),
            vmem_limit_bytes=int(vmem_limit_bytes),
        ),
    )(x, w1_b, b1_r, w2f, b2f)

    return out.reshape(*lead, C)


def reference(features, w1, b1, gamma, beta, w2, b2, eps):
    # Mirrors the module semantics; GEMM1 uses the same bf16 inputs / f32
    # accumulate as the kernel so the comparison isolates the fused-LN path.
    h = jnp.dot(features.astype(jnp.bfloat16), w1.astype(jnp.bfloat16),
                preferred_element_type=jnp.float32) + b1
    h = jnp.maximum(h, 0.0)
    mean = jnp.mean(h, axis=-1, keepdims=True)
    var = jnp.mean((h - mean) ** 2, axis=-1, keepdims=True)
    hn = (h - mean) * jax.lax.rsqrt(var + eps) * gamma + beta
    return jnp.dot(hn, w2, preferred_element_type=jnp.float32,
                   precision=jax.lax.Precision.HIGHEST) + b2


if __name__ == "__main__":
    # Small shapes consistent with the module: hidden_size=32, gen_max_len=8,
    # batch=2 -> features [2, 8, 64], output [2, 8, 20].
    hidden_size, gen_max_len, batch = 32, 8, 2
    D = hidden_size * 2          # LayerNorm / Linear width = 64
    C = 20                       # decoder vocabulary (20 amino acids)
    eps = 1e-12

    key = jax.random.PRNGKey(0)
    ks = jax.random.split(key, 7)
    features = jax.random.normal(ks[0], (batch, gen_max_len, D), jnp.float32)
    bound = 1.0 / math.sqrt(D)   # PyTorch nn.Linear default init bound
    w1 = jax.random.uniform(ks[1], (D, D), jnp.float32, -bound, bound)
    b1 = jax.random.uniform(ks[2], (D,), jnp.float32, -bound, bound)
    # Non-trivial gamma/beta so the affine constant-fold is actually exercised.
    gamma = 1.0 + 0.1 * jax.random.normal(ks[3], (D,), jnp.float32)
    beta = 0.1 * jax.random.normal(ks[4], (D,), jnp.float32)
    w2 = jax.random.uniform(ks[5], (D, C), jnp.float32, -bound, bound)
    b2 = jax.random.uniform(ks[6], (C,), jnp.float32, -bound, bound)

    out = bytenet_decoder(features, w1, b1, gamma, beta, w2, b2, eps=eps)
    jax.block_until_ready(out)

    ref = reference(features, w1, b1, gamma, beta, w2, b2, eps)
    assert out.shape == (batch, gen_max_len, C), out.shape
    max_err = float(jnp.max(jnp.abs(out - ref)))
    assert jnp.allclose(out, ref, atol=2e-2, rtol=2e-2), max_err
    print("KERNEL_OK")
</pallas_src>

<mosaic_0001>
module attributes {stable_mosaic.version = 11 : i64} {
  func.func @_bytenet_decoder_kernel(%arg0: i32, %arg1: memref<16x64xf32, #tpu.memory_space<vmem>>, %arg2: memref<64x64xbf16, #tpu.memory_space<vmem>>, %arg3: memref<1x64xf32, #tpu.memory_space<vmem>>, %arg4: memref<64x20xbf16, #tpu.memory_space<vmem>>, %arg5: memref<1x20xf32, #tpu.memory_space<vmem>>, %arg6: memref<16x20xf32, #tpu.memory_space<vmem>>) attributes {dimension_semantics = [#tpu.dimension_semantics<parallel>], iteration_bounds = array<i64: 1>, scalar_prefetch = 0 : i64, scratch_operands = 0 : i64, tpu.core_type = #tpu.core_type<tc>, window_params = [{transform_indices = @transform_0, window_bounds = array<i64: 16, 64>}, {pipeline_mode = #tpu.pipeline_mode<synchronous>, transform_indices = @transform_1, window_bounds = array<i64: 64, 64>}, {pipeline_mode = #tpu.pipeline_mode<synchronous>, transform_indices = @transform_2, window_bounds = array<i64: 1, 64>}, {pipeline_mode = #tpu.pipeline_mode<synchronous>, transform_indices = @transform_3, window_bounds = array<i64: 64, 20>}, {pipeline_mode = #tpu.pipeline_mode<synchronous>, transform_indices = @transform_4, window_bounds = array<i64: 1, 20>}, {transform_indices = @transform_5, window_bounds = array<i64: 16, 20>}]} {
    %c0 = arith.constant 0 : index
    %c0_0 = arith.constant 0 : index
    %0 = vector.load %arg1[%c0, %c0_0] : memref<16x64xf32, #tpu.memory_space<vmem>>, vector<16x64xf32>
    %1 = arith.truncf %0 : vector<16x64xf32> to vector<16x64xbf16>
    %c0_1 = arith.constant 0 : index
    %c0_2 = arith.constant 0 : index
    %2 = vector.load %arg2[%c0_1, %c0_2] : memref<64x64xbf16, #tpu.memory_space<vmem>>, vector<64x64xbf16>
    %cst = arith.constant dense<0.000000e+00> : vector<16x64xf32>
    %3 = tpu.matmul %1, %2, %cst {dimension_numbers = #tpu.dot_dimension_numbers<[1], [0], [0], [1], [0, 0, 1, 1], [], []>} : vector<16x64xbf16>, vector<64x64xbf16>, vector<16x64xf32> -> vector<16x64xf32>
    %c0_3 = arith.constant 0 : index
    %c0_4 = arith.constant 0 : index
    %4 = vector.load %arg3[%c0_3, %c0_4] : memref<1x64xf32, #tpu.memory_space<vmem>>, vector<1x64xf32>
    %5 = vector.broadcast %4 : vector<1x64xf32> to vector<16x64xf32>
    %6 = arith.addf %3, %5 : vector<16x64xf32>
    %cst_5 = arith.constant 0.000000e+00 : f32
    %7 = vector.broadcast %cst_5 : f32 to vector<16x64xf32>
    %8 = arith.maximumf %6, %7 : vector<16x64xf32>
    %cst_6 = arith.constant dense<0.000000e+00> : vector<16xf32>
    %9 = vector.multi_reduction <add>, %8, %cst_6 [1] : vector<16x64xf32> to vector<16xf32>
    %10 = vector.shape_cast %9 : vector<16xf32> to vector<16x1xf32>
    %cst_7 = arith.constant 6.400000e+01 : f32
    %11 = vector.broadcast %cst_7 : f32 to vector<16x1xf32>
    %12 = arith.divf %10, %11 : vector<16x1xf32>
    %13 = vector.broadcast %12 : vector<16x1xf32> to vector<16x64xf32>
    %14 = arith.subf %8, %13 : vector<16x64xf32>
    %15 = arith.mulf %14, %14 : vector<16x64xf32>
    %cst_8 = arith.constant dense<0.000000e+00> : vector<16xf32>
    %16 = vector.multi_reduction <add>, %15, %cst_8 [1] : vector<16x64xf32> to vector<16xf32>
    %17 = vector.shape_cast %16 : vector<16xf32> to vector<16x1xf32>
    %cst_9 = arith.constant 6.400000e+01 : f32
    %18 = vector.broadcast %cst_9 : f32 to vector<16x1xf32>
    %19 = arith.divf %17, %18 : vector<16x1xf32>
    %cst_10 = arith.constant 9.99999996E-13 : f32
    %20 = vector.broadcast %cst_10 : f32 to vector<16x1xf32>
    %21 = arith.addf %19, %20 : vector<16x1xf32>
    %22 = math.rsqrt %21 : vector<16x1xf32>
    %23 = vector.broadcast %22 : vector<16x1xf32> to vector<16x64xf32>
    %24 = arith.mulf %14, %23 : vector<16x64xf32>
    %25 = arith.truncf %24 : vector<16x64xf32> to vector<16x64xbf16>
    %c0_11 = arith.constant 0 : index
    %c0_12 = arith.constant 0 : index
    %26 = vector.load %arg4[%c0_11, %c0_12] : memref<64x20xbf16, #tpu.memory_space<vmem>>, vector<64x20xbf16>
    %cst_13 = arith.constant dense<0.000000e+00> : vector<16x20xf32>
    %27 = tpu.matmul %25, %26, %cst_13 {dimension_numbers = #tpu.dot_dimension_numbers<[1], [0], [0], [1], [0, 0, 1, 1], [], []>} : vector<16x64xbf16>, vector<64x20xbf16>, vector<16x20xf32> -> vector<16x20xf32>
    %c0_14 = arith.constant 0 : index
    %c0_15 = arith.constant 0 : index
    %28 = vector.load %arg5[%c0_14, %c0_15] : memref<1x20xf32, #tpu.memory_space<vmem>>, vector<1x20xf32>
    %29 = vector.broadcast %28 : vector<1x20xf32> to vector<16x20xf32>
    %30 = arith.addf %27, %29 : vector<16x20xf32>
    %c0_16 = arith.constant 0 : index
    %c0_17 = arith.constant 0 : index
    %31 = vector.load %arg6[%c0_16, %c0_17] : memref<16x20xf32, #tpu.memory_space<vmem>>, vector<16x20xf32>
    tpu.vector_store %arg6[%c0_16, %c0_17], %30 {strides = array<i32>} : memref<16x20xf32, #tpu.memory_space<vmem>>, vector<16x20xf32>,
    return
  }
  func.func @transform_0(%arg0: i32) -> (i32, i32) {
    %c0_i32 = arith.constant 0 : i32
    %c0_i32_0 = arith.constant 0 : i32
    return %arg0, %c0_i32 : i32, i32
  }
  func.func @transform_1(%arg0: i32) -> (i32, i32) {
    %c0_i32 = arith.constant 0 : i32
    %c0_i32_0 = arith.constant 0 : i32
    %c0_i32_1 = arith.constant 0 : i32
    return %c0_i32, %c0_i32_0 : i32, i32
  }
  func.func @transform_2(%arg0: i32) -> (i32, i32) {
    %c0_i32 = arith.constant 0 : i32
    %c0_i32_0 = arith.constant 0 : i32
    %c0_i32_1 = arith.constant 0 : i32
    return %c0_i32, %c0_i32_0 : i32, i32
  }
  func.func @transform_3(%arg0: i32) -> (i32, i32) {
    %c0_i32 = arith.constant 0 : i32
    %c0_i32_0 = arith.constant 0 : i32
    %c0_i32_1 = arith.constant 0 : i32
    return %c0_i32, %c0_i32_0 : i32, i32
  }
  func.func @transform_4(%arg0: i32) -> (i32, i32) {
    %c0_i32 = arith.constant 0 : i32
    %c0_i32_0 = arith.constant 0 : i32
    %c0_i32_1 = arith.constant 0 : i32
    return %c0_i32, %c0_i32_0 : i32, i32
  }
  func.func @transform_5(%arg0: i32) -> (i32, i32) {
    %c0_i32 = arith.constant 0 : i32
    %c0_i32_0 = arith.constant 0 : i32
    return %arg0, %c0_i32 : i32, i32
  }
}

</mosaic_0001>

<llo_original>
// kernel: tpu_custom_call.1
$region0: #{tpu_custom_call.1}
  #allocation0 [shape = 'u32[]', space=smem, size = 0x4, offset = 0x4, fixed_abs, tag = 'smem constant byte address 0x4 - core index']
  #allocation1 [shape = 'u32[72,128]{1,0:T(1,128)}', space=vmem, size = 0x9000, scoped, tag = 'internal scratch']
  %s0 = inlined_call_operand.hbm [shape: f32[16,64], index: 0, kind: input, shape index: {}]
  %s1 = inlined_call_operand.vmem [shape: bf16[64,64], index: 1, kind: input, shape index: {}]
  %s2 = inlined_call_operand.vmem [shape: f32[1,64], index: 2, kind: input, shape index: {}]
  %s3 = inlined_call_operand.vmem [shape: bf16[64,20], index: 3, kind: input, shape index: {}]
  %s4 = inlined_call_operand.vmem [shape: f32[1,20], index: 4, kind: input, shape index: {}]
  %s5 = inlined_call_operand.hbm [shape: f32[16,20], index: 5, kind: output, shape index: {}]
  %s6 = sld [smem:[#allocation0]]
  $region34: #{tpu_custom_call.1} parent=0
    _
  %s8 = ssub.s32 1, %s6
  %s9 = scalar_select 0, %s8, %s6
  $region1: #{tpu_custom_call.1} parent=0
    #allocation2 [shape = 'u8[8192]{0}', space=vmem, size = 0x2000, scoped, tag = 'input window, operand 0, single buffered']
    #allocation3 [shape = 's32[1]{0}', space=sflag, size = 0x4, scoped, tag = 'scoped memory for tpu_custom_call.1']
    #allocation4 [shape = 's32[1]{0}', space=sflag, size = 0x4, scoped, tag = 'scoped memory for tpu_custom_call.1']
    #allocation5 [shape = 'u8[8192]{0}', space=vmem, size = 0x2000, scoped, tag = 'output window, operand 0, single buffered']
    %10 = vsyncpa [#allocation3], 0
    %11 = vsyncpa [#allocation4], 0
    // Predicated region
    $region2: #{tpu_custom_call.1} parent=1 // pred_check
      _
    $region3: #{tpu_custom_call.1} parent=1 // pred_check_branch
      %13 = sbr.rel (0) target = $region5
    $region4: #{tpu_custom_call.1} parent=1 // pred_region
      %15 = vsyncadd [#allocation3], 0
      %s16 = sshll.u32 %s0, 4
      %s17 = int_to_ptr.hbm [resolvable:$true] %s16
      %s18 = sshll.u32 [#allocation2], 4
      %s19 = int_to_ptr.vmem [resolvable:$true] %s18
      %24 = dma.hbm_to_vmem [thread:$0]  %s17, 256, %s19, [#allocation3], 128, 128, 8
    $region5: #{tpu_custom_call.1} parent=1 // pred_fallthru
      _
    // Predicated region
    $region6: #{tpu_custom_call.1} parent=1 // pred_check
      _
    $region7: #{tpu_custom_call.1} parent=1 // pred_check_branch
      %26 = sbr.rel (0) target = $region9
    $region8: #{tpu_custom_call.1} parent=1 // pred_region
      _
    $region9: #{tpu_custom_call.1} parent=1 // pred_fallthru
      _
    // Predicated region
    $region10: #{tpu_custom_call.1} parent=1 // pred_check
      _
    $region11: #{tpu_custom_call.1} parent=1 // pred_check_branch
      %28 = sbr.rel (0) target = $region13
    $region12: #{tpu_custom_call.1} parent=1 // pred_region
      _
    $region13: #{tpu_custom_call.1} parent=1 // pred_fallthru
      _
    // Predicated region
    $region14: #{tpu_custom_call.1} parent=1 // pred_check
      _
    $region15: #{tpu_custom_call.1} parent=1 // pred_check_branch
      %30 = sbr.rel (0) target = $region17
    $region16: #{tpu_custom_call.1} parent=1 // pred_region
      _
    $region17: #{tpu_custom_call.1} parent=1 // pred_fallthru
      _
    // Predicated region
    $region18: #{tpu_custom_call.1} parent=1 // pred_check
      _
    $region19: #{tpu_custom_call.1} parent=1 // pred_check_branch
      %32 = sbr.rel (0) target = $region21
    $region20: #{tpu_custom_call.1} parent=1 // pred_region
      _
    $region21: #{tpu_custom_call.1} parent=1 // pred_fallthru
      _
    // Predicated region
    $region22: #{tpu_custom_call.1} parent=1 // pred_check
      _
    $region23: #{tpu_custom_call.1} parent=1 // pred_check_branch
      %34 = sbr.rel (0) target = $region25
    $region24: #{tpu_custom_call.1} parent=1 // pred_region
      %36 = dma.done [#allocation3], 256
    $region25: #{tpu_custom_call.1} parent=1 // pred_fallthru
      _
    %v38 = vld [vmem:[#allocation2] sm:$0xff]
    %v39 = vld [vmem:[#allocation2 + $0x8] sm:$0xff]
    %v40 = vpack.c.bf16 %v39, %v38
    %v41 = vld [vmem:[%s1] sm:$0xf]
    %v42 = vld [vmem:[%s1 + $0x4] sm:$0xf]
    %v43 = vld [vmem:[%s1 + $0x8] sm:$0xf]
    %v44 = vld [vmem:[%s1 + $0xc] sm:$0xf]
    %v45 = vld [vmem:[%s1 + $0x10] sm:$0xf]
    %v46 = vld [vmem:[%s1 + $0x14] sm:$0xf]
    %v47 = vld [vmem:[%s1 + $0x18] sm:$0xf]
    %v48 = vld [vmem:[%s1 + $0x1c] sm:$0xf]
    %v49 = vld [vmem:[%s2] sm:$0x1]
    %v51 = vperm.slane %v49, 0
    %v61 = vunpack.c.l.b16 %v41
    %v62 = vunpack.c.l.b16 %v42
    %v63 = vunpack.c.l.b16 %v43
    %v64 = vunpack.c.l.b16 %v44
    %v65 = vunpack.c.l.b16 %v45
    %v66 = vunpack.c.l.b16 %v46
    %v67 = vunpack.c.l.b16 %v47
    %v68 = vunpack.c.l.b16 %v48
    %v69 = vpack.c.b16 %v62, %v61
    %v70 = vpack.c.b16 %v64, %v63
    %v71 = vpack.c.b16 %v66, %v65
    %v72 = vpack.c.b16 %v68, %v67
    %vm77 = vcmask 523264
    %v79 = vsel %vm77, %v40, 0
    %81 = vmatpush.bf16.msra.mxu0 0
    %82 = vmatpush.bf16.msra.mxu0 0
    %83 = vmatpush.bf16.msra.mxu0 0
    %84 = vmatpush.bf16.msra.mxu0 0
    %85 = vmatpush.bf16.msra.mxu0 %v72
    %86 = vmatpush.bf16.msra.mxu0 %v71
    %87 = vmatpush.bf16.msra.mxu0 %v70
    %88 = vmatpush.bf16.msra.mxu0 %v69
    %89 = vmatmul.bf16.gmra.mxu0 %v79
    %v90 = vpop.f32.mrf.mxu0
    %v91 = vadd.f32 %v51, %v90
    %v92 = vpop.f32.mrf.mxu0
    %v93 = vadd.f32 %v51, %v92
    %94 = vdwg.mxu0
    %v95 = vmax.f32 %v91, 0.0
    %v96 = vmax.f32 %v93, 0.0
    %v97 = vsel %vm77, %v95, 0.0
    %98 = vadd.xlane.f32.xlu0 %v97
    %v99 = vpop.xlane.xlu0 %98
    %v100 = vsel %vm77, %v96, 0.0
    %101 = vadd.xlane.f32.xlu0 %v100
    %v102 = vpop.xlane.xlu0 %101
    %v103 = vrcp.pop 64.0
    %v104 = vmul.f32 64.0, %v103
    %v105 = vsub.f32 1.0, %v104
    %v106 = vmul.f32 %v103, %v105
    %v107 = vadd.f32 %v103, %v106
    %vm108 = vweird.f32 %v103
    %v109 = vsel %vm108, %v103, %v107
    %v110 = vmul.f32 %v99, %v109
    %v111 = vmul.f32 %v102, %v109
    %v112 = vsub.f32 %v95, %v110
    %v113 = vsub.f32 %v96, %v111
    %v114 = vmul.f32 %v112, %v112
    %v115 = vmul.f32 %v113, %v113
    %v116 = vsel %vm77, %v114, 0.0
    %117 = vadd.xlane.f32.xlu0 %v116
    %v118 = vpop.xlane.xlu0 %117
    %v119 = vsel %vm77, %v115, 0.0
    %120 = vadd.xlane.f32.xlu0 %v119
    %v121 = vpop.xlane.xlu0 %120
    %v122 = vmul.f32 %v118, %v109
    %v123 = vmul.f32 %v121, %v109
    %v124 = vadd.f32 %v122, 1e-12
    %v125 = vadd.f32 %v123, 1e-12
    %v126 = vrsqrt.pop %v124
    %v127 = vmul.f32 %v126, %v124
    %v128 = vmul.f32 %v127, %v126
    %v129 = vmul.f32 0.5, %v128
    %v130 = vsub.f32 1.5, %v129
    %v131 = vmul.f32 %v126, %v130
    %vm132 = vweird.f32 %v124
    %vm133 = vweird.f32 %v126
    %vm134 = vmor %vm132, %vm133
    %v135 = vsel %vm134, %v126, %v131
    %v136 = vrsqrt.pop %v125
    %v137 = vmul.f32 %v136, %v125
    %v138 = vmul.f32 %v137, %v136
    %v139 = vmul.f32 0.5, %v138
    %v140 = vsub.f32 1.5, %v139
    %v141 = vmul.f32 %v136, %v140
    %vm142 = vweird.f32 %v125
    %vm143 = vweird.f32 %v136
    %vm144 = vmor %vm142, %vm143
    %v145 = vsel %vm144, %v136, %v141
    %v146 = vmul.f32 %v112, %v135
    %v147 = vmul.f32 %v113, %v145
    %v148 = vpack.c.bf16 %v147, %v146
    %v149 = vld [vmem:[%s3] sm:$0xf]
    %v150 = vld [vmem:[%s3 + $0x4] sm:$0xf]
    %v151 = vld [vmem:[%s3 + $0x8] sm:$0xf]
    %v152 = vld [vmem:[%s3 + $0xc] sm:$0xf]
    %v153 = vld [vmem:[%s3 + $0x10] sm:$0xf]
    %v154 = vld [vmem:[%s3 + $0x14] sm:$0xf]
    %v155 = vld [vmem:[%s3 + $0x18] sm:$0xf]
    %v156 = vld [vmem:[%s3 + $0x1c] sm:$0xf]
    %v157 = vld [vmem:[%s4] sm:$0x1]
    %v159 = vperm.slane %v157, 0
    %v169 = vunpack.c.l.b16 %v149
    %v170 = vunpack.c.l.b16 %v150
    %v171 = vunpack.c.l.b16 %v151
    %v172 = vunpack.c.l.b16 %v152
    %v173 = vunpack.c.l.b16 %v153
    %v174 = vunpack.c.l.b16 %v154
    %v175 = vunpack.c.l.b16 %v155
    %v176 = vunpack.c.l.b16 %v156
    %v177 = vpack.c.b16 %v170, %v169
    %v178 = vpack.c.b16 %v172, %v171
    %v179 = vpack.c.b16 %v174, %v173
    %v180 = vpack.c.b16 %v176, %v175
    %v186 = vsel %vm77, %v148, 0
    %188 = vmatpush.bf16.msra.mxu0 0
    %189 = vmatpush.bf16.msra.mxu0 0
    %190 = vmatpush.bf16.msra.mxu0 0
    %191 = vmatpush.bf16.msra.mxu0 0
    %192 = vmatpush.bf16.msra.mxu0 %v180
    %193 = vmatpush.bf16.msra.mxu0 %v179
    %194 = vmatpush.bf16.msra.mxu0 %v178
    %195 = vmatpush.bf16.msra.mxu0 %v177
    %196 = vmatmul.bf16.gmra.mxu0 %v186
    %v197 = vpop.f32.mrf.mxu0
    %v198 = vadd.f32 %v159, %v197
    %v199 = vpop.f32.mrf.mxu0
    %v200 = vadd.f32 %v159, %v199
    %201 = vdwg.mxu0
    %vm202 = vcmask 162816
    %203 = vst.msk [vmem:[#allocation5] sm:$0xff] %vm202, %v198
    %204 = vst.msk [vmem:[#allocation5 + $0x8] sm:$0xff] %vm202, %v200
    // Predicated region
    $region26: #{tpu_custom_call.1} parent=1 // pred_check
      _
    $region27: #{tpu_custom_call.1} parent=1 // pred_check_branch
      %206 = sbr.rel (0) target = $region29
    $region28: #{tpu_custom_call.1} parent=1 // pred_region
      %208 = vsyncadd [#allocation4], 0
      %s209 = sshll.u32 [#allocation5], 4
      %s210 = int_to_ptr.vmem [resolvable:$true] %s209
      %s211 = sshll.u32 %s5, 4
      %s212 = int_to_ptr.hbm [resolvable:$true] %s211
      %217 = dma.vmem_to_hbm [thread:$0]  %s210, 256, %s212, [#allocation4], 128, 128, 8
    $region29: #{tpu_custom_call.1} parent=1 // pred_fallthru
      _
    // Predicated region
    $region30: #{tpu_custom_call.1} parent=1 // pred_check
      _
    $region31: #{tpu_custom_call.1} parent=1 // pred_check_branch
      %219 = sbr.rel (0) target = $region33
    $region32: #{tpu_custom_call.1} parent=1 // pred_region
      %221 = dma.done [#allocation4], 256
    $region33: #{tpu_custom_call.1} parent=1 // pred_fallthru
      _
    %222 = vsyncpa [#allocation3], 1
    %223 = vsyncpa [#allocation4], 1

</llo_original>
